<compile_context>
chip_gen: v7x
topology: tpu7x:2x2x1
jax: 0.10.0
libtpu: 0.0.40
codegen_flags: <defaults>
</compile_context>

<pallas_src>
import functools
import math

import jax
import jax.numpy as jnp
from jax.experimental import pallas as pl
from jax.experimental.pallas import tpu as pltpu


def _round_up(v, m):
    return ((v + m - 1) // m) * m


_TK_CANDIDATES = (2048, 1024, 512, 256, 128)   # reduction / lane tile of (A + I)
_TM_CANDIDATES = (512, 256, 128)               # output row tile
_XW_RESIDENT_BUDGET_BYTES = 8 << 20            # resident XW (double-buffered) budget,
                                               # well under v7x's 32 MiB scoped default


def _choose_tiles(n):
    """Pick (n_pad, tm, tk).

    Tiles are 128 * 2^a.  Big tiles (512+) reach ~85% of the HBM roofline, so take
    the largest reduction tile whose zero-padding overhead on the N x N adjacency
    stream stays small (<= 1/8 extra rows).  tm is kept <= tk (so lcm == tk) and
    small enough that grid[0] >= 2 whenever possible (v7x megacore sharding of the
    'parallel' row axis)."""
    p = _round_up(max(n, 1), 128)
    tk = 128
    for cand in _TK_CANDIDATES:
        if _round_up(p, cand) - p <= p // 8:
            tk = cand
            break
    n_pad = _round_up(p, tk)
    tm = 128
    for cand in _TM_CANDIDATES:
        if cand <= tk and n_pad % cand == 0 and (n_pad // cand >= 2 or cand == 128):
            tm = cand
            break
    return n_pad, tm, tk


def gcn_vencoder_kernel(a_ref, xw_ref, dis_ref, b_ref, out_ref, *, xw_resident):
    """One grid step of the fused (mu|logstd) GCN aggregation.

    a_ref   : [TM, TK] int8      tile of (A + I)  (dominant HBM stream, int8)
    xw_ref  : [N_pad, C_pad] bf16 resident  OR  [TK, C_pad] bf16 k-tiled
              right-normalized transformed features  D^-1/2 * (x @ W_cat)
    dis_ref : [TM, 1] f32        left normalization  deg^-1/2 of the output rows
    b_ref   : [1, C_pad] f32     fused (mu|logstd) bias, lane-padded
    out_ref : [TM, C_pad] f32    fused output; block index is (i, 0) for every k,
              so it stays VMEM-resident across the reduction and doubles as the
              accumulator (no separate scratch).
    """
    k = pl.program_id(1)

    @pl.when(k == 0)
    def _init():
        out_ref[...] = jnp.zeros_like(out_ref)

    if xw_resident:
        tk = a_ref.shape[1]
        off = pl.multiple_of(k * tk, 128)
        xw_k = xw_ref[pl.ds(off, tk), :]
    else:
        xw_k = xw_ref[...]

    # int8 {0,1,...} -> f32 -> bf16 is exact; the VPU casts hide under the A-tile
    # DMA (kernel is HBM-bound).  bf16 x bf16 matmul with f32 MXU accumulation.
    a_bf16 = a_ref[...].astype(jnp.float32).astype(jnp.bfloat16)
    out_ref[...] += jnp.dot(a_bf16, xw_k, preferred_element_type=jnp.float32)

    @pl.when(k == pl.num_programs(1) - 1)
    def _finalize():
        # Left D^-1/2 (f32 per-row scale) and bias, applied exactly once.
        out_ref[...] = out_ref[...] * dis_ref[...] + b_ref[...]


def build_adjacency_and_norm(edge_index, num_nodes):
    """Factored form of PyG gcn_norm:  A_hat = D^-1/2 (A + I) D^-1/2.

    Returns (A + I) as int8 (exact, halves the dominant HBM stream) plus the f32
    deg^-1/2 vector.  Source->target message flow: adj[i, j] = #edges j -> i."""
    src = edge_index[0]
    dst = edge_index[1]
    adj = jnp.zeros((num_nodes, num_nodes), jnp.float32).at[dst, src].add(1.0)
    adj = adj + jnp.eye(num_nodes, dtype=jnp.float32)          # add self-loops
    deg = jnp.sum(adj, axis=1)                                 # in-degree incl. self-loop
    deg_inv_sqrt = jnp.where(deg > 0, jax.lax.rsqrt(deg), 0.0)
    # Edge multiplicities assumed < 128 (true for simple graphs).
    return adj.astype(jnp.int8), deg_inv_sqrt


def variational_linear_encoder(x, edge_index, w_mu, b_mu, w_ls, b_ls):
    """mu = A_hat @ (x @ W_mu) + b_mu ; logstd = A_hat @ (x @ W_ls) + b_ls.

    Both heads run in ONE Pallas aggregation kernel over a fused, lane-padded
    [C_in, 2*C_out] weight; x @ W_cat is hoisted out of the grid."""
    n, c_in = x.shape
    c_out = w_mu.shape[1]
    c_cat = 2 * c_out
    c_pad = _round_up(c_cat, 128)              # lane-dense fused output width

    # ---- fuse the two heads (glue, plain JAX) ----
    w_cat = jnp.concatenate([w_mu, w_ls], axis=1)                          # [C_in, 2*C_out]
    w_cat = jnp.pad(w_cat, ((0, 0), (0, c_pad - c_cat))).astype(jnp.float32)
    b_cat = jnp.concatenate([b_mu.reshape(1, -1), b_ls.reshape(1, -1)], axis=1)
    b_cat = jnp.pad(b_cat, ((0, 0), (0, c_pad - c_cat))).astype(jnp.float32)

    # ---- graph glue: integer (A + I) + f32 normalization, factored ----
    a_plus_i, deg_inv_sqrt = build_adjacency_and_norm(edge_index, n)

    n_pad, tm, tk = _choose_tiles(n)
    grid = (n_pad // tm, n_pad // tk)

    a_p = jnp.pad(a_plus_i, ((0, n_pad - n), (0, n_pad - n)))              # int8 [N, N]
    dis_p = jnp.pad(deg_inv_sqrt, (0, n_pad - n)).reshape(n_pad, 1)        # f32  [N, 1]
    dis_p = dis_p.astype(jnp.float32)

    # ---- hoisted feature transform: f32 compute, right D^-1/2 folded in, ONE bf16 cast ----
    xw = jnp.dot(x.astype(jnp.float32), w_cat, preferred_element_type=jnp.float32)
    xw_scaled = (xw * deg_inv_sqrt[:, None]).astype(jnp.bfloat16)
    xw_p = jnp.pad(xw_scaled, ((0, n_pad - n), (0, 0)))                    # bf16 [N, C_pad]

    # Resident XW when its (double-buffered) footprint comfortably fits the scoped
    # VMEM budget on every generation (incl. v7x's 64 MiB physical / 32 MiB default);
    # otherwise stream it per reduction block.
    xw_resident = 2 * n_pad * c_pad * 2 <= _XW_RESIDENT_BUDGET_BYTES
    if xw_resident:
        xw_spec = pl.BlockSpec((n_pad, c_pad), lambda i, k: (0, 0))
    else:
        xw_spec = pl.BlockSpec((tk, c_pad), lambda i, k: (k, 0))

    # Advisory cost estimate: aggregation FLOPs; bytes dominated by int8 (A + I).
    xw_reads = 1 if xw_resident else grid[0]
    flops = int(2 * n_pad * n_pad * c_pad)
    bytes_accessed = int(n_pad * n_pad                     # int8 (A + I)
                         + 2 * n_pad * c_pad * xw_reads    # bf16 XW
                         + 4 * n_pad * c_pad               # f32 output
                         + 4 * n_pad + 4 * c_pad)          # deg^-1/2 + bias

    out = pl.pallas_call(
        functools.partial(gcn_vencoder_kernel, xw_resident=xw_resident),
        out_shape=jax.ShapeDtypeStruct((n_pad, c_pad), jnp.float32),
        grid_spec=pltpu.PrefetchScalarGridSpec(
            num_scalar_prefetch=0,
            grid=grid,
            in_specs=[
                pl.BlockSpec((tm, tk), lambda i, k: (i, k)),       # int8 (A+I) tile
                xw_spec,                                           # bf16 XW (resident / k-tiled)
                pl.BlockSpec((tm, 1), lambda i, k: (i, 0)),        # f32 row deg^-1/2
                pl.BlockSpec((1, c_pad), lambda i, k: (0, 0)),     # f32 fused bias
            ],
            out_specs=pl.BlockSpec((tm, c_pad), lambda i, k: (i, 0)),
        ),
        compiler_params=pltpu.CompilerParams(
            dimension_semantics=("parallel", "arbitrary")),
        cost_estimate=pl.CostEstimate(flops=flops, transcendentals=0,
                                      bytes_accessed=bytes_accessed),
    )(a_p, xw_p, dis_p, b_cat)

    out = out[:n, :c_cat]                  # drop row / lane padding
    mu = out[:, :c_out]
    logstd = out[:, c_out:]
    return mu, logstd


if __name__ == "__main__":
    # Small deterministic problem consistent with GCNConv(in_channels, out_channels).
    N = 16            # number of graph nodes
    C_IN = 8          # in_channels
    C_OUT = 4         # out_channels

    key = jax.random.PRNGKey(0)
    kx, kmu, kls = jax.random.split(key, 3)

    # Node features.
    x = jax.random.normal(kx, (N, C_IN), dtype=jnp.float32)

    # Deterministic ring graph (bidirectional): edge_index shape [2, 2N].
    idx = jnp.arange(N)
    src = jnp.concatenate([idx, (idx + 1) % N])
    dst = jnp.concatenate([(idx + 1) % N, idx])
    edge_index = jnp.stack([src, dst], axis=0)  # [2, E]

    # GCNConv parameters (glorot-ish init, deterministic; bias zeros like PyG default).
    scale = jnp.sqrt(6.0 / (C_IN + C_OUT))
    w_mu = jax.random.uniform(kmu, (C_IN, C_OUT), jnp.float32, -scale, scale)
    b_mu = jnp.zeros((1, C_OUT), jnp.float32)
    w_ls = jax.random.uniform(kls, (C_IN, C_OUT), jnp.float32, -scale, scale)
    b_ls = jnp.zeros((1, C_OUT), jnp.float32)

    mu, logstd = variational_linear_encoder(x, edge_index, w_mu, b_mu, w_ls, b_ls)
    jax.block_until_ready((mu, logstd))
    assert mu.shape == (N, C_OUT) and logstd.shape == (N, C_OUT)

    # ---- pure-JAX references ----
    a_i8, dis = build_adjacency_and_norm(edge_index, N)
    a_f = a_i8.astype(jnp.float32)
    w_cat = jnp.concatenate([w_mu, w_ls], axis=1)
    b_cat = jnp.concatenate([b_mu.reshape(1, -1), b_ls.reshape(1, -1)], axis=1)

    # (a) mirror of the kernel math (single bf16 rounding of the scaled XW).
    xw_q = ((x @ w_cat) * dis[:, None]).astype(jnp.bfloat16).astype(jnp.float32)
    ref_q = dis[:, None] * (a_f @ xw_q) + b_cat
    # (b) full-f32 GCNConv semantics (PyTorch parity, loose tolerance).
    a_hat = dis[:, None] * a_f * dis[None, :]
    ref_f = a_hat @ (x @ w_cat) + b_cat

    out_cat = jnp.concatenate([mu, logstd], axis=1)
    assert jnp.allclose(out_cat, ref_q, atol=1e-4, rtol=1e-4), "mismatch vs kernel-math ref"
    assert jnp.allclose(out_cat, ref_f, atol=2e-2, rtol=2e-2), "mismatch vs f32 GCNConv ref"

    print("KERNEL_OK")
</pallas_src>

<mosaic_0001>
module attributes {stable_mosaic.version = 11 : i64} {
  func.func @gcn_vencoder_kernel(%arg0: i32, %arg1: i32, %arg2: memref<128x128xi8, #tpu.memory_space<vmem>>, %arg3: memref<128x128xbf16, #tpu.memory_space<vmem>>, %arg4: memref<128x1xf32, #tpu.memory_space<vmem>>, %arg5: memref<1x128xf32, #tpu.memory_space<vmem>>, %arg6: memref<128x128xf32, #tpu.memory_space<vmem>>) attributes {dimension_semantics = [#tpu.dimension_semantics<parallel>, #tpu.dimension_semantics<arbitrary>], iteration_bounds = array<i64: 1, 1>, scalar_prefetch = 0 : i64, scratch_operands = 0 : i64, tpu.core_type = #tpu.core_type<tc>, window_params = [{transform_indices = @transform_0, window_bounds = array<i64: 128, 128>}, {pipeline_mode = #tpu.pipeline_mode<synchronous>, transform_indices = @transform_1, window_bounds = array<i64: 128, 128>}, {transform_indices = @transform_2, window_bounds = array<i64: 128, 1>}, {pipeline_mode = #tpu.pipeline_mode<synchronous>, transform_indices = @transform_3, window_bounds = array<i64: 1, 128>}, {transform_indices = @transform_4, window_bounds = array<i64: 128, 128>}]} {
    %c0_i32 = arith.constant 0 : i32
    %0 = arith.cmpi eq, %arg1, %c0_i32 : i32
    %1 = arith.extui %0 : i1 to i32
    %c0_i32_0 = arith.constant 0 : i32
    %2 = arith.cmpi ne, %1, %c0_i32_0 : i32
    scf.if %2 {
      %cst_9 = arith.constant 0.000000e+00 : f32
      %17 = vector.broadcast %cst_9 : f32 to vector<128x128xf32>
      %c0_10 = arith.constant 0 : index
      %c0_11 = arith.constant 0 : index
      %18 = vector.load %arg6[%c0_10, %c0_11] : memref<128x128xf32, #tpu.memory_space<vmem>>, vector<128x128xf32>
      tpu.vector_store %arg6[%c0_10, %c0_11], %17 {strides = array<i32>} : memref<128x128xf32, #tpu.memory_space<vmem>>, vector<128x128xf32>,
    } else {
    }
    %c128_i32 = arith.constant 128 : i32
    %3 = arith.muli %arg1, %c128_i32 : i32
    %4 = tpu.assume_multiple %3, 128 : i32
    %5 = arith.index_cast %4 : i32 to index
    %c0 = arith.constant 0 : index
    %6 = vector.load %arg3[%5, %c0] : memref<128x128xbf16, #tpu.memory_space<vmem>>, vector<128x128xbf16>
    %c0_1 = arith.constant 0 : index
    %c0_2 = arith.constant 0 : index
    %7 = vector.load %arg2[%c0_1, %c0_2] : memref<128x128xi8, #tpu.memory_space<vmem>>, vector<128x128xi8>
    %8 = arith.sitofp %7 : vector<128x128xi8> to vector<128x128xf32>
    %9 = arith.truncf %8 : vector<128x128xf32> to vector<128x128xbf16>
    %c0_3 = arith.constant 0 : index
    %c0_4 = arith.constant 0 : index
    %10 = vector.load %arg6[%c0_3, %c0_4] : memref<128x128xf32, #tpu.memory_space<vmem>>, vector<128x128xf32>
    %cst = arith.constant dense<0.000000e+00> : vector<128x128xf32>
    %11 = tpu.matmul %9, %6, %cst {dimension_numbers = #tpu.dot_dimension_numbers<[1], [0], [0], [1], [0, 0, 1, 1], [], []>} : vector<128x128xbf16>, vector<128x128xbf16>, vector<128x128xf32> -> vector<128x128xf32>
    %12 = arith.addf %10, %11 : vector<128x128xf32>
    %c0_5 = arith.constant 0 : index
    %c0_6 = arith.constant 0 : index
    %13 = vector.load %arg6[%c0_5, %c0_6] : memref<128x128xf32, #tpu.memory_space<vmem>>, vector<128x128xf32>
    tpu.vector_store %arg6[%c0_5, %c0_6], %12 {strides = array<i32>} : memref<128x128xf32, #tpu.memory_space<vmem>>, vector<128x128xf32>,
    %c0_i32_7 = arith.constant 0 : i32
    %14 = arith.cmpi eq, %arg1, %c0_i32_7 : i32
    %15 = arith.extui %14 : i1 to i32
    %c0_i32_8 = arith.constant 0 : i32
    %16 = arith.cmpi ne, %15, %c0_i32_8 : i32
    scf.if %16 {
      %c0_9 = arith.constant 0 : index
      %c0_10 = arith.constant 0 : index
      %17 = vector.load %arg6[%c0_9, %c0_10] : memref<128x128xf32, #tpu.memory_space<vmem>>, vector<128x128xf32>
      %c0_11 = arith.constant 0 : index
      %c0_12 = arith.constant 0 : index
      %18 = vector.load %arg4[%c0_11, %c0_12] : memref<128x1xf32, #tpu.memory_space<vmem>>, vector<128x1xf32>
      %19 = vector.broadcast %18 : vector<128x1xf32> to vector<128x128xf32>
      %20 = arith.mulf %17, %19 : vector<128x128xf32>
      %c0_13 = arith.constant 0 : index
      %c0_14 = arith.constant 0 : index
      %21 = vector.load %arg5[%c0_13, %c0_14] : memref<1x128xf32, #tpu.memory_space<vmem>>, vector<1x128xf32>
      %22 = vector.broadcast %21 : vector<1x128xf32> to vector<128x128xf32>
      %23 = arith.addf %20, %22 : vector<128x128xf32>
      %c0_15 = arith.constant 0 : index
      %c0_16 = arith.constant 0 : index
      %24 = vector.load %arg6[%c0_15, %c0_16] : memref<128x128xf32, #tpu.memory_space<vmem>>, vector<128x128xf32>
      tpu.vector_store %arg6[%c0_15, %c0_16], %23 {strides = array<i32>} : memref<128x128xf32, #tpu.memory_space<vmem>>, vector<128x128xf32>,
    } else {
    }
    return
  }
  func.func @transform_0(%arg0: i32, %arg1: i32) -> (i32, i32) {
    %c0_i32 = arith.constant 0 : i32
    return %arg0, %arg1 : i32, i32
  }
  func.func @transform_1(%arg0: i32, %arg1: i32) -> (i32, i32) {
    %c0_i32 = arith.constant 0 : i32
    %c0_i32_0 = arith.constant 0 : i32
    %c0_i32_1 = arith.constant 0 : i32
    return %c0_i32, %c0_i32_0 : i32, i32
  }
  func.func @transform_2(%arg0: i32, %arg1: i32) -> (i32, i32) {
    %c0_i32 = arith.constant 0 : i32
    %c0_i32_0 = arith.constant 0 : i32
    return %arg0, %c0_i32 : i32, i32
  }
  func.func @transform_3(%arg0: i32, %arg1: i32) -> (i32, i32) {
    %c0_i32 = arith.constant 0 : i32
    %c0_i32_0 = arith.constant 0 : i32
    %c0_i32_1 = arith.constant 0 : i32
    return %c0_i32, %c0_i32_0 : i32, i32
  }
  func.func @transform_4(%arg0: i32, %arg1: i32) -> (i32, i32) {
    %c0_i32 = arith.constant 0 : i32
    %c0_i32_0 = arith.constant 0 : i32
    return %arg0, %c0_i32 : i32, i32
  }
}

</mosaic_0001>

<llo_original>
// kernel: tpu_custom_call.1
$region0: #{tpu_custom_call.1}
  #allocation0 [shape = 'u32[]', space=smem, size = 0x4, offset = 0x4, fixed_abs, tag = 'smem constant byte address 0x4 - core index']
  #allocation1 [shape = 'u32[144,128]{1,0:T(1,128)}', space=vmem, size = 0x12000, scoped, tag = 'internal scratch']
  %s0 = inlined_call_operand.vmem [shape: s8[128,128], index: 0, kind: input, shape index: {}]
  %s1 = inlined_call_operand.vmem [shape: bf16[128,128], index: 1, kind: input, shape index: {}]
  %s2 = inlined_call_operand.vmem [shape: f32[128,1], index: 2, kind: input, shape index: {}]
  %s3 = inlined_call_operand.vmem [shape: f32[1,128], index: 3, kind: input, shape index: {}]
  %s4 = inlined_call_operand.hbm [shape: f32[128,128], index: 4, kind: output, shape index: {}]
  %s5 = sld [smem:[#allocation0]]
  $region34: #{tpu_custom_call.1} parent=0
    _
  %s7 = ssub.s32 1, %s5
  %s8 = scalar_select 0, %s7, %s5
  $region1: #{tpu_custom_call.1} parent=0
    #allocation2 [shape = 'u8[65536]{0}', space=vmem, size = 0x10000, scoped, tag = 'output window, operand 0, single buffered']
    #allocation3 [shape = 's32[1]{0}', space=sflag, size = 0x4, scoped, tag = 'scoped memory for tpu_custom_call.1']
    %9 = vsyncpa [#allocation3], 0
    // Predicated region
    $region2: #{tpu_custom_call.1} parent=1 // pred_check
      _
    $region3: #{tpu_custom_call.1} parent=1 // pred_check_branch
      %11 = sbr.rel (0) target = $region5
    $region4: #{tpu_custom_call.1} parent=1 // pred_region
      _
    $region5: #{tpu_custom_call.1} parent=1 // pred_fallthru
      _
    // Predicated region
    $region6: #{tpu_custom_call.1} parent=1 // pred_check
      _
    $region7: #{tpu_custom_call.1} parent=1 // pred_check_branch
      %13 = sbr.rel (0) target = $region9
    $region8: #{tpu_custom_call.1} parent=1 // pred_region
      _
    $region9: #{tpu_custom_call.1} parent=1 // pred_fallthru
      _
    // Predicated region
    $region10: #{tpu_custom_call.1} parent=1 // pred_check
      _
    $region11: #{tpu_custom_call.1} parent=1 // pred_check_branch
      %15 = sbr.rel (0) target = $region13
    $region12: #{tpu_custom_call.1} parent=1 // pred_region
      _
    $region13: #{tpu_custom_call.1} parent=1 // pred_fallthru
      _
    // Predicated region
    $region14: #{tpu_custom_call.1} parent=1 // pred_check
      _
    $region15: #{tpu_custom_call.1} parent=1 // pred_check_branch
      %17 = sbr.rel (0) target = $region17
    $region16: #{tpu_custom_call.1} parent=1 // pred_region
      _
    $region17: #{tpu_custom_call.1} parent=1 // pred_fallthru
      _
    %p19 = scmp.eq.s32.totalorder 0, 0
    // Predicated region
    $region18: #{tpu_custom_call.1} parent=1 // pred_check
      %p20 = pneg %p19
    $region19: #{tpu_custom_call.1} parent=1 // pred_check_branch
      %22 = sbr.rel (%p20) target = $region21
    $region20: #{tpu_custom_call.1} parent=1 // pred_region
      %23 = vst [vmem:[#allocation2] sm:$0xff] 0.0
      %24 = vst [vmem:[#allocation2 + $0x8] sm:$0xff] 0.0
      %25 = vst [vmem:[#allocation2 + $0x10] sm:$0xff] 0.0
      %26 = vst [vmem:[#allocation2 + $0x18] sm:$0xff] 0.0
      %27 = vst [vmem:[#allocation2 + $0x20] sm:$0xff] 0.0
      %28 = vst [vmem:[#allocation2 + $0x28] sm:$0xff] 0.0
      %29 = vst [vmem:[#allocation2 + $0x30] sm:$0xff] 0.0
      %30 = vst [vmem:[#allocation2 + $0x38] sm:$0xff] 0.0
      %31 = vst [vmem:[#allocation2 + $0x40] sm:$0xff] 0.0
      %32 = vst [vmem:[#allocation2 + $0x48] sm:$0xff] 0.0
      %33 = vst [vmem:[#allocation2 + $0x50] sm:$0xff] 0.0
      %34 = vst [vmem:[#allocation2 + $0x58] sm:$0xff] 0.0
      %35 = vst [vmem:[#allocation2 + $0x60] sm:$0xff] 0.0
      %36 = vst [vmem:[#allocation2 + $0x68] sm:$0xff] 0.0
      %37 = vst [vmem:[#allocation2 + $0x70] sm:$0xff] 0.0
      %38 = vst [vmem:[#allocation2 + $0x78] sm:$0xff] 0.0
    $region21: #{tpu_custom_call.1} parent=1 // pred_fallthru
      _
    %s39 = smul.u32 0, 128
    %s40 = sshra.s32 %s39, 3
    %s41 = sand.u32 %s39, 7
    %s42 = smul.addr %s40, 4
    %s43 = scalar_lea.vmem %s1, %s42
    %v44 = vld [vmem:[%s43] sm:$0xf]
    %v45 = vld [vmem:[%s43 + $0x4] sm:$0xf]
    %v46 = vld [vmem:[%s43 + $0x8] sm:$0xf]
    %v47 = vld [vmem:[%s43 + $0xc] sm:$0xf]
    %v48 = vld [vmem:[%s43 + $0x10] sm:$0xf]
    %v49 = vld [vmem:[%s43 + $0x14] sm:$0xf]
    %v50 = vld [vmem:[%s43 + $0x18] sm:$0xf]
    %v51 = vld [vmem:[%s43 + $0x1c] sm:$0xf]
    %v52 = vld [vmem:[%s43 + $0x20] sm:$0xf]
    %v53 = vld [vmem:[%s43 + $0x24] sm:$0xf]
    %v54 = vld [vmem:[%s43 + $0x28] sm:$0xf]
    %v55 = vld [vmem:[%s43 + $0x2c] sm:$0xf]
    %v56 = vld [vmem:[%s43 + $0x30] sm:$0xf]
    %v57 = vld [vmem:[%s43 + $0x34] sm:$0xf]
    %v58 = vld [vmem:[%s43 + $0x38] sm:$0xf]
    %v59 = vld [vmem:[%s43 + $0x3c] sm:$0xf]
    %v60 = vld [vmem:[%s0] sm:$0xff]
    %v61 = vld [vmem:[%s0 + $0x8] sm:$0xff]
    %v62 = vld [vmem:[%s0 + $0x10] sm:$0xff]
    %v63 = vld [vmem:[%s0 + $0x18] sm:$0xff]
    %v64 = vunpack.c.l.s8.bf16 %v60
    %v65 = vunpack.c.h.s8.bf16 %v60
    %v66 = vunpack.c.l.s8.bf16 %v61
    %v67 = vunpack.c.h.s8.bf16 %v61
    %v68 = vunpack.c.l.s8.bf16 %v62
    %v69 = vunpack.c.h.s8.bf16 %v62
    %v70 = vunpack.c.l.s8.bf16 %v63
    %v71 = vunpack.c.h.s8.bf16 %v63
    %v72 = vld [vmem:[#allocation2] sm:$0xff]
    %v73 = vld [vmem:[#allocation2 + $0x8] sm:$0xff]
    %v74 = vld [vmem:[#allocation2 + $0x10] sm:$0xff]
    %v75 = vld [vmem:[#allocation2 + $0x18] sm:$0xff]
    %v76 = vld [vmem:[#allocation2 + $0x20] sm:$0xff]
    %v77 = vld [vmem:[#allocation2 + $0x28] sm:$0xff]
    %v78 = vld [vmem:[#allocation2 + $0x30] sm:$0xff]
    %v79 = vld [vmem:[#allocation2 + $0x38] sm:$0xff]
    %v80 = vld [vmem:[#allocation2 + $0x40] sm:$0xff]
    %v81 = vld [vmem:[#allocation2 + $0x48] sm:$0xff]
    %v82 = vld [vmem:[#allocation2 + $0x50] sm:$0xff]
    %v83 = vld [vmem:[#allocation2 + $0x58] sm:$0xff]
    %v84 = vld [vmem:[#allocation2 + $0x60] sm:$0xff]
    %v85 = vld [vmem:[#allocation2 + $0x68] sm:$0xff]
    %v86 = vld [vmem:[#allocation2 + $0x70] sm:$0xff]
    %v87 = vld [vmem:[#allocation2 + $0x78] sm:$0xff]
    %v104 = vunpack.c.l.b16 %v44
    %v105 = vunpack.c.l.b16 %v45
    %v106 = vunpack.c.l.b16 %v46
    %v107 = vunpack.c.l.b16 %v47
    %v108 = vunpack.c.l.b16 %v48
    %v109 = vunpack.c.l.b16 %v49
    %v110 = vunpack.c.l.b16 %v50
    %v111 = vunpack.c.l.b16 %v51
    %v112 = vunpack.c.l.b16 %v52
    %v113 = vunpack.c.l.b16 %v53
    %v114 = vunpack.c.l.b16 %v54
    %v115 = vunpack.c.l.b16 %v55
    %v116 = vunpack.c.l.b16 %v56
    %v117 = vunpack.c.l.b16 %v57
    %v118 = vunpack.c.l.b16 %v58
    %v119 = vunpack.c.l.b16 %v59
    %v120 = vpack.c.b16 %v105, %v104
    %v121 = vpack.c.b16 %v107, %v106
    %v122 = vpack.c.b16 %v109, %v108
    %v123 = vpack.c.b16 %v111, %v110
    %v124 = vpack.c.b16 %v113, %v112
    %v125 = vpack.c.b16 %v115, %v114
    %v126 = vpack.c.b16 %v117, %v116
    %v127 = vpack.c.b16 %v119, %v118
    %136 = vmatprep.subr.bf16.mxu0 0
    %137 = vmatpush1.bf16.msra.mxu0 %v120
    %138 = vmatprep.subr.bf16.mxu0 0
    %139 = vmatpush1.bf16.msra.mxu0 %v121
    %140 = vmatprep.subr.bf16.mxu0 0
    %141 = vmatpush1.bf16.msra.mxu0 %v122
    %142 = vmatprep.subr.bf16.mxu0 0
    %143 = vmatpush1.bf16.msra.mxu0 %v123
    %144 = vmatprep.subr.bf16.mxu0 0
    %145 = vmatpush1.bf16.msra.mxu0 %v124
    %146 = vmatprep.subr.bf16.mxu0 0
    %147 = vmatpush1.bf16.msra.mxu0 %v125
    %148 = vmatprep.subr.bf16.mxu0 0
    %149 = vmatpush1.bf16.msra.mxu0 %v126
    %150 = vmatprep.subr.bf16.mxu0 0
    %151 = vmatpush1.bf16.msra.mxu0 %v127
    %152 = vmatprep.subr.bf16.mxu0 0
    %153 = vmatpush1.bf16.msra.mxu0 0
    %154 = vmatprep.subr.bf16.mxu0 0
    %155 = vmatpush1.bf16.msra.mxu0 0
    %156 = vmatprep.subr.bf16.mxu0 0
    %157 = vmatpush1.bf16.msra.mxu0 0
    %158 = vmatprep.subr.bf16.mxu0 0
    %159 = vmatpush1.bf16.msra.mxu0 0
    %160 = vmatprep.subr.bf16.mxu0 0
    %161 = vmatpush1.bf16.msra.mxu0 0
    %162 = vmatprep.subr.bf16.mxu0 0
    %163 = vmatpush1.bf16.msra.mxu0 0
    %164 = vmatprep.subr.bf16.mxu0 0
    %165 = vmatpush1.bf16.msra.mxu0 0
    %166 = vmatprep.subr.bf16.mxu0 0
    %167 = vmatpush1.bf16.msra.mxu0 0
    %168 = vmatprep.mubr.bf16.mxu0 0
    %169 = vmatmul.mubr.bf16.gmra.mrb[0].mxu0 %v64
    %v170 = vpop.f32.mrb[0].mxu0
    %v171 = vadd.f32 0.0, %v170
    %v172 = vpop.f32.mrb[0].mxu0
    %v173 = vpop.f32.mrb[0].mxu0
    %v174 = vadd.f32 0.0, %v173
    %v175 = vpop.f32.mrb[0].mxu0
    %176 = vmatprep.mubr.bf16.mxu0 0
    %177 = vmatmul.mubr.bf16.gmra.mrb[0].mxu0 %v65
    %v178 = vpop.f32.mrb[0].mxu0
    %v179 = vadd.f32 0.0, %v178
    %v180 = vpop.f32.mrb[0].mxu0
    %v181 = vpop.f32.mrb[0].mxu0
    %v182 = vadd.f32 0.0, %v181
    %v183 = vpop.f32.mrb[0].mxu0
    %184 = vmatprep.mubr.bf16.mxu0 0
    %185 = vmatmul.mubr.bf16.gmra.mrb[0].mxu0 %v66
    %v186 = vpop.f32.mrb[0].mxu0
    %v187 = vadd.f32 0.0, %v186
    %v188 = vpop.f32.mrb[0].mxu0
    %v189 = vpop.f32.mrb[0].mxu0
    %v190 = vadd.f32 0.0, %v189
    %v191 = vpop.f32.mrb[0].mxu0
    %192 = vmatprep.mubr.bf16.mxu0 0
    %193 = vmatmul.mubr.bf16.gmra.mrb[0].mxu0 %v67
    %v194 = vpop.f32.mrb[0].mxu0
    %v195 = vadd.f32 0.0, %v194
    %v196 = vpop.f32.mrb[0].mxu0
    %v197 = vpop.f32.mrb[0].mxu0
    %v198 = vadd.f32 0.0, %v197
    %v199 = vpop.f32.mrb[0].mxu0
    %200 = vmatprep.mubr.bf16.mxu0 0
    %201 = vmatmul.mubr.bf16.gmra.mrb[0].mxu0 %v68
    %v202 = vpop.f32.mrb[0].mxu0
    %v203 = vadd.f32 0.0, %v202
    %v204 = vpop.f32.mrb[0].mxu0
    %v205 = vpop.f32.mrb[0].mxu0
    %v206 = vadd.f32 0.0, %v205
    %v207 = vpop.f32.mrb[0].mxu0
    %208 = vmatprep.mubr.bf16.mxu0 0
    %209 = vmatmul.mubr.bf16.gmra.mrb[0].mxu0 %v69
    %v210 = vpop.f32.mrb[0].mxu0
    %v211 = vadd.f32 0.0, %v210
    %v212 = vpop.f32.mrb[0].mxu0
    %v213 = vpop.f32.mrb[0].mxu0
    %v214 = vadd.f32 0.0, %v213
    %v215 = vpop.f32.mrb[0].mxu0
    %216 = vmatprep.mubr.bf16.mxu0 0
    %217 = vmatmul.mubr.bf16.gmra.mrb[0].mxu0 %v70
    %v218 = vpop.f32.mrb[0].mxu0
    %v219 = vadd.f32 0.0, %v218
    %v220 = vpop.f32.mrb[0].mxu0
    %v221 = vpop.f32.mrb[0].mxu0
    %v222 = vadd.f32 0.0, %v221
    %v223 = vpop.f32.mrb[0].mxu0
    %224 = vmatprep.mubr.bf16.mxu0 0
    %225 = vmatmul.mubr.bf16.gmra.mrb[0].mxu0 %v71
    %v226 = vpop.f32.mrb[0].mxu0
    %v227 = vadd.f32 0.0, %v226
    %v228 = vpop.f32.mrb[0].mxu0
    %v229 = vpop.f32.mrb[0].mxu0
    %v230 = vadd.f32 0.0, %v229
    %v231 = vpop.f32.mrb[0].mxu0
    %232 = vdwg.mxu0
    %v233 = vadd.f32 %v72, %v171
    %v234 = vadd.f32 %v73, %v174
    %v235 = vadd.f32 %v74, %v179
    %v236 = vadd.f32 %v75, %v182
    %v237 = vadd.f32 %v76, %v187
    %v238 = vadd.f32 %v77, %v190
    %v239 = vadd.f32 %v78, %v195
    %v240 = vadd.f32 %v79, %v198
    %v241 = vadd.f32 %v80, %v203
    %v242 = vadd.f32 %v81, %v206
    %v243 = vadd.f32 %v82, %v211
    %v244 = vadd.f32 %v83, %v214
    %v245 = vadd.f32 %v84, %v219
    %v246 = vadd.f32 %v85, %v222
    %v247 = vadd.f32 %v86, %v227
    %v248 = vadd.f32 %v87, %v230
    %249 = vst [vmem:[#allocation2] sm:$0xff] %v233
    %250 = vst [vmem:[#allocation2 + $0x8] sm:$0xff] %v234
    %251 = vst [vmem:[#allocation2 + $0x10] sm:$0xff] %v235
    %252 = vst [vmem:[#allocation2 + $0x18] sm:$0xff] %v236
    %253 = vst [vmem:[#allocation2 + $0x20] sm:$0xff] %v237
    %254 = vst [vmem:[#allocation2 + $0x28] sm:$0xff] %v238
    %255 = vst [vmem:[#allocation2 + $0x30] sm:$0xff] %v239
    %256 = vst [vmem:[#allocation2 + $0x38] sm:$0xff] %v240
    %257 = vst [vmem:[#allocation2 + $0x40] sm:$0xff] %v241
    %258 = vst [vmem:[#allocation2 + $0x48] sm:$0xff] %v242
    %259 = vst [vmem:[#allocation2 + $0x50] sm:$0xff] %v243
    %260 = vst [vmem:[#allocation2 + $0x58] sm:$0xff] %v244
    %261 = vst [vmem:[#allocation2 + $0x60] sm:$0xff] %v245
    %262 = vst [vmem:[#allocation2 + $0x68] sm:$0xff] %v246
    %263 = vst [vmem:[#allocation2 + $0x70] sm:$0xff] %v247
    %264 = vst [vmem:[#allocation2 + $0x78] sm:$0xff] %v248
    // Predicated region
    $region22: #{tpu_custom_call.1} parent=1 // pred_check
      %p265 = pneg %p19
    $region23: #{tpu_custom_call.1} parent=1 // pred_check_branch
      %267 = sbr.rel (%p265) target = $region25
    $region24: #{tpu_custom_call.1} parent=1 // pred_region
      %v268 = vld [vmem:[#allocation2] sm:$0xff]
      %v269 = vld [vmem:[#allocation2 + $0x8] sm:$0xff]
      %v270 = vld [vmem:[#allocation2 + $0x10] sm:$0xff]
      %v271 = vld [vmem:[#allocation2 + $0x18] sm:$0xff]
      %v272 = vld [vmem:[#allocation2 + $0x20] sm:$0xff]
      %v273 = vld [vmem:[#allocation2 + $0x28] sm:$0xff]
      %v274 = vld [vmem:[#allocation2 + $0x30] sm:$0xff]
      %v275 = vld [vmem:[#allocation2 + $0x38] sm:$0xff]
      %v276 = vld [vmem:[#allocation2 + $0x40] sm:$0xff]
      %v277 = vld [vmem:[#allocation2 + $0x48] sm:$0xff]
      %v278 = vld [vmem:[#allocation2 + $0x50] sm:$0xff]
      %v279 = vld [vmem:[#allocation2 + $0x58] sm:$0xff]
      %v280 = vld [vmem:[#allocation2 + $0x60] sm:$0xff]
      %v281 = vld [vmem:[#allocation2 + $0x68] sm:$0xff]
      %v282 = vld [vmem:[#allocation2 + $0x70] sm:$0xff]
      %v283 = vld [vmem:[#allocation2 + $0x78] sm:$0xff]
      %v284 = vld [vmem:[%s2] sm:$0xff]
      %v285 = vld [vmem:[%s2 + $0x8] sm:$0xff]
      %v286 = vld [vmem:[%s2 + $0x10] sm:$0xff]
      %v287 = vld [vmem:[%s2 + $0x18] sm:$0xff]
      %v288 = vld [vmem:[%s2 + $0x20] sm:$0xff]
      %v289 = vld [vmem:[%s2 + $0x28] sm:$0xff]
      %v290 = vld [vmem:[%s2 + $0x30] sm:$0xff]
      %v291 = vld [vmem:[%s2 + $0x38] sm:$0xff]
      %v292 = vld [vmem:[%s2 + $0x40] sm:$0xff]
      %v293 = vld [vmem:[%s2 + $0x48] sm:$0xff]
      %v294 = vld [vmem:[%s2 + $0x50] sm:$0xff]
      %v295 = vld [vmem:[%s2 + $0x58] sm:$0xff]
      %v296 = vld [vmem:[%s2 + $0x60] sm:$0xff]
      %v297 = vld [vmem:[%s2 + $0x68] sm:$0xff]
      %v298 = vld [vmem:[%s2 + $0x70] sm:$0xff]
      %v299 = vld [vmem:[%s2 + $0x78] sm:$0xff]
      %301 = vset.pattern.permute.xlu0 0
      %302 = vperm.xlu0 %301, %v284
      %v303 = vpop.permute.xlu0 %302
      %306 = vset.pattern.permute.xlu0 0
      %307 = vperm.xlu0 %306, %v285
      %v308 = vpop.permute.xlu0 %307
      %311 = vset.pattern.permute.xlu0 0
      %312 = vperm.xlu0 %311, %v286
      %v313 = vpop.permute.xlu0 %312
      %316 = vset.pattern.permute.xlu0 0
      %317 = vperm.xlu0 %316, %v287
      %v318 = vpop.permute.xlu0 %317
      %321 = vset.pattern.permute.xlu0 0
      %322 = vperm.xlu0 %321, %v288
      %v323 = vpop.permute.xlu0 %322
      %326 = vset.pattern.permute.xlu0 0
      %327 = vperm.xlu0 %326, %v289
      %v328 = vpop.permute.xlu0 %327
      %331 = vset.pattern.permute.xlu0 0
      %332 = vperm.xlu0 %331, %v290
      %v333 = vpop.permute.xlu0 %332
      %336 = vset.pattern.permute.xlu0 0
      %337 = vperm.xlu0 %336, %v291
      %v338 = vpop.permute.xlu0 %337
      %341 = vset.pattern.permute.xlu0 0
      %342 = vperm.xlu0 %341, %v292
      %v343 = vpop.permute.xlu0 %342
      %346 = vset.pattern.permute.xlu0 0
      %347 = vperm.xlu0 %346, %v293
      %v348 = vpop.permute.xlu0 %347
      %351 = vset.pattern.permute.xlu0 0
      %352 = vperm.xlu0 %351, %v294
      %v353 = vpop.permute.xlu0 %352
      %356 = vset.pattern.permute.xlu0 0
      %357 = vperm.xlu0 %356, %v295
      %v358 = vpop.permute.xlu0 %357
      %361 = vset.pattern.permute.xlu0 0
      %362 = vperm.xlu0 %361, %v296
      %v363 = vpop.permute.xlu0 %362
      %366 = vset.pattern.permute.xlu0 0
      %367 = vperm.xlu0 %366, %v297
      %v368 = vpop.permute.xlu0 %367
      %371 = vset.pattern.permute.xlu0 0
      %372 = vperm.xlu0 %371, %v298
      %v373 = vpop.permute.xlu0 %372
      %376 = vset.pattern.permute.xlu0 0
      %377 = vperm.xlu0 %376, %v299
      %v378 = vpop.permute.xlu0 %377
      %v380 = vmul.f32 %v268, %v303
      %v381 = vmul.f32 %v269, %v308
      %v382 = vmul.f32 %v270, %v313
      %v383 = vmul.f32 %v271, %v318
      %v384 = vmul.f32 %v272, %v323
      %v385 = vmul.f32 %v273, %v328
      %v386 = vmul.f32 %v274, %v333
      %v387 = vmul.f32 %v275, %v338
      %v388 = vmul.f32 %v276, %v343
      %v389 = vmul.f32 %v277, %v348
      %v390 = vmul.f32 %v278, %v353
      %v391 = vmul.f32 %v279, %v358
      %v392 = vmul.f32 %v280, %v363
      %v393 = vmul.f32 %v281, %v368
      %v394 = vmul.f32 %v282, %v373
      %v395 = vmul.f32 %v283, %v378
      %v396 = vld [vmem:[%s3] sm:$0x1]
      %v398 = vlaneseq
      %v399 = vshrl.u32 %v398, 7
      %v400 = vsub.s32 0, %v399
      %v401 = vrot.slane %v396, %v400
      %v403 = vadd.f32 %v380, %v401
      %v404 = vadd.f32 %v381, %v401
      %v405 = vadd.f32 %v382, %v401
      %v406 = vadd.f32 %v383, %v401
      %v407 = vadd.f32 %v384, %v401
      %v408 = vadd.f32 %v385, %v401
      %v409 = vadd.f32 %v386, %v401
      %v410 = vadd.f32 %v387, %v401
      %v411 = vadd.f32 %v388, %v401
      %v412 = vadd.f32 %v389, %v401
      %v413 = vadd.f32 %v390, %v401
      %v414 = vadd.f32 %v391, %v401
      %v415 = vadd.f32 %v392, %v401
      %v416 = vadd.f32 %v393, %v401
      %v417 = vadd.f32 %v394, %v401
      %v418 = vadd.f32 %v395, %v401
      %419 = vst [vmem:[#allocation2] sm:$0xff] %v403
      %420 = vst [vmem:[#allocation2 + $0x8] sm:$0xff] %v404
      %421 = vst [vmem:[#allocation2 + $0x10] sm:$0xff] %v405
      %422 = vst [vmem:[#allocation2 + $0x18] sm:$0xff] %v406
      %423 = vst [vmem:[#allocation2 + $0x20] sm:$0xff] %v407
      %424 = vst [vmem:[#allocation2 + $0x28] sm:$0xff] %v408
      %425 = vst [vmem:[#allocation2 + $0x30] sm:$0xff] %v409
      %426 = vst [vmem:[#allocation2 + $0x38] sm:$0xff] %v410
      %427 = vst [vmem:[#allocation2 + $0x40] sm:$0xff] %v411
      %428 = vst [vmem:[#allocation2 + $0x48] sm:$0xff] %v412
      %429 = vst [vmem:[#allocation2 + $0x50] sm:$0xff] %v413
      %430 = vst [vmem:[#allocation2 + $0x58] sm:$0xff] %v414
      %431 = vst [vmem:[#allocation2 + $0x60] sm:$0xff] %v415
      %432 = vst [vmem:[#allocation2 + $0x68] sm:$0xff] %v416
      %433 = vst [vmem:[#allocation2 + $0x70] sm:$0xff] %v417
      %434 = vst [vmem:[#allocation2 + $0x78] sm:$0xff] %v418
    $region25: #{tpu_custom_call.1} parent=1 // pred_fallthru
      _
    // Predicated region
    $region26: #{tpu_custom_call.1} parent=1 // pred_check
      _
    $region27: #{tpu_custom_call.1} parent=1 // pred_check_branch
      %436 = sbr.rel (0) target = $region29
    $region28: #{tpu_custom_call.1} parent=1 // pred_region
      %s438 = ssub.s32 2048, 2048
      %439 = vsyncadd [#allocation3], %s438
      %s440 = sshll.u32 [#allocation2], 4
      %s441 = int_to_ptr.vmem [resolvable:$true] %s440
      %446 = dma.vmem_to_hbm [thread:$0]  %s441, 2048, %s4, [#allocation3], 128, 128, 8
    $region29: #{tpu_custom_call.1} parent=1 // pred_fallthru
      _
    // Predicated region
    $region30: #{tpu_custom_call.1} parent=1 // pred_check
      _
    $region31: #{tpu_custom_call.1} parent=1 // pred_check_branch
      %448 = sbr.rel (0) target = $region33
    $region32: #{tpu_custom_call.1} parent=1 // pred_region
      %449 = dma.done [#allocation3], 2048
    $region33: #{tpu_custom_call.1} parent=1 // pred_fallthru
      _
    %450 = vsyncpa [#allocation3], 1

</llo_original>
